<compile_context>
chip_gen: v6e
topology: v6e:2x2x1
jax: 0.10.0
libtpu: 0.0.40
codegen_flags: <defaults>
</compile_context>

<pallas_src>
import functools

import numpy as np
import jax
import jax.numpy as jnp
from jax import lax
from jax.experimental import pallas as pl
from jax.experimental.pallas import tpu as pltpu

EPS = 1e-12


def _id_kernel(tgt_ref, s_ref, t_ref, out_ref, *, n_total):
    blk = pl.program_id(0)
    B, C, L = s_ref.shape

    @pl.when(blk == 0)
    def _():
        out_ref[...] = jnp.zeros_like(out_ref)

    tgt = tgt_ref[...].astype(jnp.float32)                 # (B, C)

    # le_student * le_mask : scale rows by their target value (matches reference)
    s = s_ref[...].astype(jnp.float32) * tgt[:, :, None]   # (B, C, L)
    t = t_ref[...].astype(jnp.float32) * tgt[:, :, None]

    m = (tgt != 0).astype(jnp.float32)                     # selected-row mask (B, C)

    # off-diagonal pair mask built on the VPU (no MXU outer product)
    rows = lax.broadcasted_iota(jnp.int32, (C, C), 0)
    cols = lax.broadcasted_iota(jnp.int32, (C, C), 1)
    not_eye = (rows != cols).astype(jnp.float32)           # (C, C)
    pair_off = (m[:, :, None] * m[:, None, :]) * not_eye[None]   # (B, C, C)

    def pdist(e):
        # batched gram on the MXU; squared norms computed directly on the VPU
        g = jnp.einsum('bcl,bkl->bck', e, e,
                       preferred_element_type=jnp.float32)       # (B, C, C)
        sq = jnp.sum(e * e, axis=-1)                             # (B, C)
        d2 = jnp.maximum(sq[:, :, None] + sq[:, None, :] - 2.0 * g, EPS)
        return jnp.sqrt(d2) * pair_off                           # masked, zero diag

    d_s = pdist(s)
    d_t = pdist(t)

    k = jnp.sum(m, axis=1, keepdims=True)                  # (B, 1) #selected rows
    n_off = jnp.maximum(k * (k - 1.0), 1.0)                # positive off-diag pairs
    inv_n_all = 1.0 / jnp.maximum(k * k, 1.0)              # SmoothL1 'mean' denom

    sum_s = jnp.sum(jnp.sum(d_s, axis=2), axis=1, keepdims=True)   # (B, 1)
    sum_t = jnp.sum(jnp.sum(d_t, axis=2), axis=1, keepdims=True)
    inv_ms = (1.0 / jnp.maximum(sum_s / n_off, EPS))[:, :, None]   # (B, 1, 1)
    inv_mt = (1.0 / jnp.maximum(sum_t / n_off, EPS))[:, :, None]

    # masked entries of d_s / d_t are exactly zero -> diff = 0 -> huber = 0,
    # so no extra pair multiply is needed on the Huber term.
    diff = jnp.abs(d_s * inv_ms - d_t * inv_mt)            # (B, C, C)
    huber = jnp.where(diff < 1.0, 0.5 * diff * diff, diff - 0.5)
    loss_b = jnp.sum(jnp.sum(huber, axis=2), axis=1, keepdims=True) * inv_n_all

    # gate: only instances with target-sum > 1 contribute; also mask block padding
    raw = jnp.sum(tgt, axis=1, keepdims=True)              # (B, 1)
    idx = blk * B + lax.broadcasted_iota(jnp.int32, (B, 1), 0)
    valid = jnp.logical_and(raw > 1.0, idx < n_total)
    out_ref[...] += jnp.sum(jnp.where(valid, loss_b, 0.0), axis=0, keepdims=True)


def id_loss(le_student, le_teacher, targets):
    N, C, L = le_student.shape
    # Instances per grid step: whole batch when small (single step, no pipeline
    # overhead), otherwise 8-aligned blocks so the targets BlockSpec stays
    # sublane-aligned.  VMEM per step is B*(2*C*L + C)*4 bytes (double-buffered)
    # — trivially small here; cap B if C*L ever grows large.
    B = N if N <= 8 else 8
    num_blocks = pl.cdiv(N, B)

    kernel = functools.partial(_id_kernel, n_total=N)

    out = pl.pallas_call(
        kernel,
        out_shape=jax.ShapeDtypeStruct((1, 1), jnp.float32),
        grid=(num_blocks,),
        in_specs=[
            pl.BlockSpec((B, C), lambda i: (i, 0)),         # targets block
            pl.BlockSpec((B, C, L), lambda i: (i, 0, 0)),   # student block
            pl.BlockSpec((B, C, L), lambda i: (i, 0, 0)),   # teacher block
        ],
        # scalar loss accumulated in VMEM across the sequential grid
        out_specs=pl.BlockSpec((1, 1), lambda i: (0, 0)),
        compiler_params=pltpu.CompilerParams(
            dimension_semantics=("arbitrary",)),
    )(targets, le_student, le_teacher)
    # TODO(synk): for very large C, tile the (C,C) work and set vmem_limit_bytes
    # (v7x has only 64 MiB physical VMEM).
    return out[0, 0]


def reference_id_loss(le_student, le_teacher, targets):
    """Pure numpy reference mirroring the PyTorch module (boolean row selection)."""
    le_s = np.asarray(le_student, np.float32)
    le_t = np.asarray(le_teacher, np.float32)
    tgt = np.asarray(targets, np.float32)
    N = le_s.shape[0]

    def pdist(e):
        sq = (e * e).sum(1)
        d2 = np.maximum(sq[:, None] + sq[None, :] - 2.0 * (e @ e.T), EPS)
        d = np.sqrt(d2)
        np.fill_diagonal(d, 0.0)
        return d

    loss = 0.0
    for i in range(N):
        if tgt[i].sum() > 1:
            s_m = le_s[i] * tgt[i][:, None]
            t_m = le_t[i] * tgt[i][:, None]
            keep = ~np.all(s_m == 0, axis=1)
            s = s_m[keep]
            t = t_m[keep]
            d_s, d_t = pdist(s), pdist(t)
            d_s = d_s / d_s[d_s > 0].mean()
            d_t = d_t / d_t[d_t > 0].mean()
            diff = np.abs(d_s - d_t)
            hub = np.where(diff < 1.0, 0.5 * diff * diff, diff - 0.5)
            loss += hub.mean()
    return np.float32(loss)


if __name__ == "__main__":
    key = jax.random.PRNGKey(0)
    k1, k2, k3 = jax.random.split(key, 3)

    N, C, L = 4, 8, 32
    le_student = jax.random.normal(k1, (N, C, L), jnp.float32)
    le_teacher = jax.random.normal(k2, (N, C, L), jnp.float32)
    targets = (jax.random.uniform(k3, (N, C)) > 0.5).astype(jnp.float32)
    # deterministic/interesting rows: one multi-positive, one single-positive
    targets = targets.at[0].set(jnp.array([1, 0, 1, 1, 0, 0, 1, 0], jnp.float32))
    targets = targets.at[1].set(jnp.array([0, 1, 0, 0, 0, 0, 0, 0], jnp.float32))

    loss = id_loss(le_student, le_teacher, targets)
    loss = jax.block_until_ready(loss)

    ref = reference_id_loss(le_student, le_teacher, targets)
    assert abs(float(loss) - float(ref)) <= 1e-4 * max(1.0, abs(float(ref))), (
        float(loss), float(ref))

    print("KERNEL_OK")
</pallas_src>

<mosaic_0001>
module attributes {stable_mosaic.version = 11 : i64} {
  func.func @_id_kernel(%arg0: i32, %arg1: memref<4x8xf32, #tpu.memory_space<vmem>>, %arg2: memref<4x8x32xf32, #tpu.memory_space<vmem>>, %arg3: memref<4x8x32xf32, #tpu.memory_space<vmem>>, %arg4: memref<1x1xf32, #tpu.memory_space<vmem>>) attributes {dimension_semantics = [#tpu.dimension_semantics<arbitrary>], iteration_bounds = array<i64: 1>, scalar_prefetch = 0 : i64, scratch_operands = 0 : i64, tpu.core_type = #tpu.core_type<tc>, window_params = [{transform_indices = @transform_0, window_bounds = array<i64: 4, 8>}, {transform_indices = @transform_1, window_bounds = array<i64: 4, 8, 32>}, {transform_indices = @transform_2, window_bounds = array<i64: 4, 8, 32>}, {pipeline_mode = #tpu.pipeline_mode<synchronous>, transform_indices = @transform_3, window_bounds = array<i64: 1, 1>}]} {
    %c0_i32 = arith.constant 0 : i32
    %0 = arith.cmpi eq, %arg0, %c0_i32 : i32
    %1 = arith.extui %0 : i1 to i32
    %c0_i32_0 = arith.constant 0 : i32
    %2 = arith.cmpi ne, %1, %c0_i32_0 : i32
    scf.if %2 {
      %cst_43 = arith.constant 0.000000e+00 : f32
      %125 = vector.broadcast %cst_43 : f32 to vector<1x1xf32>
      %c0_44 = arith.constant 0 : index
      %c0_45 = arith.constant 0 : index
      %126 = vector.load %arg4[%c0_44, %c0_45] : memref<1x1xf32, #tpu.memory_space<vmem>>, vector<1x1xf32>
      tpu.vector_store %arg4[%c0_44, %c0_45], %125 {strides = array<i32>} : memref<1x1xf32, #tpu.memory_space<vmem>>, vector<1x1xf32>,
    } else {
    }
    %c0 = arith.constant 0 : index
    %c0_1 = arith.constant 0 : index
    %3 = vector.load %arg1[%c0, %c0_1] : memref<4x8xf32, #tpu.memory_space<vmem>>, vector<4x8xf32>
    %c0_2 = arith.constant 0 : index
    %c0_3 = arith.constant 0 : index
    %c0_4 = arith.constant 0 : index
    %4 = vector.load %arg2[%c0_2, %c0_3, %c0_4] : memref<4x8x32xf32, #tpu.memory_space<vmem>>, vector<4x8x32xf32>
    %5 = vector.shape_cast %3 : vector<4x8xf32> to vector<4x8x1xf32>
    %6 = vector.broadcast %5 : vector<4x8x1xf32> to vector<4x8x32xf32>
    %7 = arith.mulf %4, %6 : vector<4x8x32xf32>
    %c0_5 = arith.constant 0 : index
    %c0_6 = arith.constant 0 : index
    %c0_7 = arith.constant 0 : index
    %8 = vector.load %arg3[%c0_5, %c0_6, %c0_7] : memref<4x8x32xf32, #tpu.memory_space<vmem>>, vector<4x8x32xf32>
    %9 = vector.shape_cast %3 : vector<4x8xf32> to vector<4x8x1xf32>
    %10 = vector.broadcast %9 : vector<4x8x1xf32> to vector<4x8x32xf32>
    %11 = arith.mulf %8, %10 : vector<4x8x32xf32>
    %cst = arith.constant 0.000000e+00 : f32
    %12 = vector.broadcast %cst : f32 to vector<4x8xf32>
    %13 = arith.cmpf one, %3, %12 : vector<4x8xf32>
    %14 = arith.extui %13 : vector<4x8xi1> to vector<4x8xi32>
    %15 = arith.sitofp %14 : vector<4x8xi32> to vector<4x8xf32>
    %16 = tpu.iota {dimensions = array<i32: 0>} : vector<8x8xi32>
    %17 = tpu.iota {dimensions = array<i32: 1>} : vector<8x8xi32>
    %18 = arith.cmpi ne, %16, %17 : vector<8x8xi32>
    %19 = arith.extui %18 : vector<8x8xi1> to vector<8x8xi32>
    %20 = arith.sitofp %19 : vector<8x8xi32> to vector<8x8xf32>
    %21 = vector.shape_cast %15 : vector<4x8xf32> to vector<4x8x1xf32>
    %22 = vector.shape_cast %15 : vector<4x8xf32> to vector<4x1x8xf32>
    %23 = vector.broadcast %21 : vector<4x8x1xf32> to vector<4x8x8xf32>
    %24 = vector.broadcast %22 : vector<4x1x8xf32> to vector<4x8x8xf32>
    %25 = arith.mulf %23, %24 : vector<4x8x8xf32>
    %26 = vector.shape_cast %20 : vector<8x8xf32> to vector<1x8x8xf32>
    %27 = vector.broadcast %26 : vector<1x8x8xf32> to vector<4x8x8xf32>
    %28 = arith.mulf %25, %27 : vector<4x8x8xf32>
    "tpu.trace_start"() <{level = 10 : i32, message = "bcl,bkl->bck"}> : () -> ()
    %cst_8 = arith.constant dense<0.000000e+00> : vector<4x8x8xf32>
    %29 = tpu.matmul %7, %7, %cst_8 {dimension_numbers = #tpu.dot_dimension_numbers<[2], [2], [1], [1], [0, 0, 0, 1, 1, 1], [0], [0]>} : vector<4x8x32xf32>, vector<4x8x32xf32>, vector<4x8x8xf32> -> vector<4x8x8xf32>
    "tpu.trace_stop"() : () -> ()
    %30 = arith.mulf %7, %7 : vector<4x8x32xf32>
    %cst_9 = arith.constant dense<0.000000e+00> : vector<4x8xf32>
    %31 = vector.multi_reduction <add>, %30, %cst_9 [2] : vector<4x8x32xf32> to vector<4x8xf32>
    %32 = vector.shape_cast %31 : vector<4x8xf32> to vector<4x8x1xf32>
    %33 = vector.shape_cast %31 : vector<4x8xf32> to vector<4x1x8xf32>
    %34 = vector.broadcast %32 : vector<4x8x1xf32> to vector<4x8x8xf32>
    %35 = vector.broadcast %33 : vector<4x1x8xf32> to vector<4x8x8xf32>
    %36 = arith.addf %34, %35 : vector<4x8x8xf32>
    %cst_10 = arith.constant 2.000000e+00 : f32
    %37 = vector.broadcast %cst_10 : f32 to vector<4x8x8xf32>
    %38 = arith.mulf %37, %29 : vector<4x8x8xf32>
    %39 = arith.subf %36, %38 : vector<4x8x8xf32>
    %cst_11 = arith.constant 9.99999996E-13 : f32
    %40 = vector.broadcast %cst_11 : f32 to vector<4x8x8xf32>
    %41 = arith.maximumf %39, %40 : vector<4x8x8xf32>
    %42 = math.sqrt %41 : vector<4x8x8xf32>
    %43 = arith.mulf %42, %28 : vector<4x8x8xf32>
    "tpu.trace_start"() <{level = 10 : i32, message = "bcl,bkl->bck"}> : () -> ()
    %cst_12 = arith.constant dense<0.000000e+00> : vector<4x8x8xf32>
    %44 = tpu.matmul %11, %11, %cst_12 {dimension_numbers = #tpu.dot_dimension_numbers<[2], [2], [1], [1], [0, 0, 0, 1, 1, 1], [0], [0]>} : vector<4x8x32xf32>, vector<4x8x32xf32>, vector<4x8x8xf32> -> vector<4x8x8xf32>
    "tpu.trace_stop"() : () -> ()
    %45 = arith.mulf %11, %11 : vector<4x8x32xf32>
    %cst_13 = arith.constant dense<0.000000e+00> : vector<4x8xf32>
    %46 = vector.multi_reduction <add>, %45, %cst_13 [2] : vector<4x8x32xf32> to vector<4x8xf32>
    %47 = vector.shape_cast %46 : vector<4x8xf32> to vector<4x8x1xf32>
    %48 = vector.shape_cast %46 : vector<4x8xf32> to vector<4x1x8xf32>
    %49 = vector.broadcast %47 : vector<4x8x1xf32> to vector<4x8x8xf32>
    %50 = vector.broadcast %48 : vector<4x1x8xf32> to vector<4x8x8xf32>
    %51 = arith.addf %49, %50 : vector<4x8x8xf32>
    %cst_14 = arith.constant 2.000000e+00 : f32
    %52 = vector.broadcast %cst_14 : f32 to vector<4x8x8xf32>
    %53 = arith.mulf %52, %44 : vector<4x8x8xf32>
    %54 = arith.subf %51, %53 : vector<4x8x8xf32>
    %cst_15 = arith.constant 9.99999996E-13 : f32
    %55 = vector.broadcast %cst_15 : f32 to vector<4x8x8xf32>
    %56 = arith.maximumf %54, %55 : vector<4x8x8xf32>
    %57 = math.sqrt %56 : vector<4x8x8xf32>
    %58 = arith.mulf %57, %28 : vector<4x8x8xf32>
    %cst_16 = arith.constant dense<0.000000e+00> : vector<4xf32>
    %59 = vector.multi_reduction <add>, %15, %cst_16 [1] : vector<4x8xf32> to vector<4xf32>
    %60 = vector.shape_cast %59 : vector<4xf32> to vector<4x1xf32>
    %cst_17 = arith.constant 1.000000e+00 : f32
    %61 = vector.broadcast %cst_17 : f32 to vector<4x1xf32>
    %62 = arith.subf %60, %61 : vector<4x1xf32>
    %63 = arith.mulf %60, %62 : vector<4x1xf32>
    %cst_18 = arith.constant 1.000000e+00 : f32
    %64 = vector.broadcast %cst_18 : f32 to vector<4x1xf32>
    %65 = arith.maximumf %63, %64 : vector<4x1xf32>
    %66 = arith.mulf %60, %60 : vector<4x1xf32>
    %cst_19 = arith.constant 1.000000e+00 : f32
    %67 = vector.broadcast %cst_19 : f32 to vector<4x1xf32>
    %68 = arith.maximumf %66, %67 : vector<4x1xf32>
    %cst_20 = arith.constant 1.000000e+00 : f32
    %69 = vector.broadcast %cst_20 : f32 to vector<4x1xf32>
    %70 = arith.divf %69, %68 : vector<4x1xf32>
    %cst_21 = arith.constant dense<0.000000e+00> : vector<4x8xf32>
    %71 = vector.multi_reduction <add>, %43, %cst_21 [2] : vector<4x8x8xf32> to vector<4x8xf32>
    %cst_22 = arith.constant dense<0.000000e+00> : vector<4xf32>
    %72 = vector.multi_reduction <add>, %71, %cst_22 [1] : vector<4x8xf32> to vector<4xf32>
    %73 = vector.shape_cast %72 : vector<4xf32> to vector<4x1xf32>
    %cst_23 = arith.constant dense<0.000000e+00> : vector<4x8xf32>
    %74 = vector.multi_reduction <add>, %58, %cst_23 [2] : vector<4x8x8xf32> to vector<4x8xf32>
    %cst_24 = arith.constant dense<0.000000e+00> : vector<4xf32>
    %75 = vector.multi_reduction <add>, %74, %cst_24 [1] : vector<4x8xf32> to vector<4xf32>
    %76 = vector.shape_cast %75 : vector<4xf32> to vector<4x1xf32>
    %77 = arith.divf %73, %65 : vector<4x1xf32>
    %cst_25 = arith.constant 9.99999996E-13 : f32
    %78 = vector.broadcast %cst_25 : f32 to vector<4x1xf32>
    %79 = arith.maximumf %77, %78 : vector<4x1xf32>
    %cst_26 = arith.constant 1.000000e+00 : f32
    %80 = vector.broadcast %cst_26 : f32 to vector<4x1xf32>
    %81 = arith.divf %80, %79 : vector<4x1xf32>
    %82 = vector.shape_cast %81 : vector<4x1xf32> to vector<4x1x1xf32>
    %83 = arith.divf %76, %65 : vector<4x1xf32>
    %cst_27 = arith.constant 9.99999996E-13 : f32
    %84 = vector.broadcast %cst_27 : f32 to vector<4x1xf32>
    %85 = arith.maximumf %83, %84 : vector<4x1xf32>
    %cst_28 = arith.constant 1.000000e+00 : f32
    %86 = vector.broadcast %cst_28 : f32 to vector<4x1xf32>
    %87 = arith.divf %86, %85 : vector<4x1xf32>
    %88 = vector.shape_cast %87 : vector<4x1xf32> to vector<4x1x1xf32>
    %89 = vector.broadcast %82 : vector<4x1x1xf32> to vector<4x8x8xf32>
    %90 = arith.mulf %43, %89 : vector<4x8x8xf32>
    %91 = vector.broadcast %88 : vector<4x1x1xf32> to vector<4x8x8xf32>
    %92 = arith.mulf %58, %91 : vector<4x8x8xf32>
    %93 = arith.subf %90, %92 : vector<4x8x8xf32>
    %94 = math.absf %93 : vector<4x8x8xf32>
    %cst_29 = arith.constant 1.000000e+00 : f32
    %95 = vector.broadcast %cst_29 : f32 to vector<4x8x8xf32>
    %96 = arith.cmpf olt, %94, %95 : vector<4x8x8xf32>
    %cst_30 = arith.constant 5.000000e-01 : f32
    %97 = vector.broadcast %cst_30 : f32 to vector<4x8x8xf32>
    %98 = arith.mulf %97, %94 : vector<4x8x8xf32>
    %99 = arith.mulf %98, %94 : vector<4x8x8xf32>
    %cst_31 = arith.constant 5.000000e-01 : f32
    %100 = vector.broadcast %cst_31 : f32 to vector<4x8x8xf32>
    %101 = arith.subf %94, %100 : vector<4x8x8xf32>
    %102 = arith.select %96, %99, %101 : vector<4x8x8xi1>, vector<4x8x8xf32>
    %cst_32 = arith.constant dense<0.000000e+00> : vector<4x8xf32>
    %103 = vector.multi_reduction <add>, %102, %cst_32 [2] : vector<4x8x8xf32> to vector<4x8xf32>
    %cst_33 = arith.constant dense<0.000000e+00> : vector<4xf32>
    %104 = vector.multi_reduction <add>, %103, %cst_33 [1] : vector<4x8xf32> to vector<4xf32>
    %105 = vector.shape_cast %104 : vector<4xf32> to vector<4x1xf32>
    %106 = arith.mulf %105, %70 : vector<4x1xf32>
    %cst_34 = arith.constant dense<0.000000e+00> : vector<4xf32>
    %107 = vector.multi_reduction <add>, %3, %cst_34 [1] : vector<4x8xf32> to vector<4xf32>
    %108 = vector.shape_cast %107 : vector<4xf32> to vector<4x1xf32>
    %c4_i32 = arith.constant 4 : i32
    %109 = arith.muli %arg0, %c4_i32 : i32
    %110 = tpu.iota {dimensions = array<i32: 0>} : vector<4x1xi32>
    %111 = vector.broadcast %109 : i32 to vector<4x1xi32>
    %112 = arith.addi %111, %110 : vector<4x1xi32>
    %cst_35 = arith.constant 1.000000e+00 : f32
    %113 = vector.broadcast %cst_35 : f32 to vector<4x1xf32>
    %114 = arith.cmpf ogt, %108, %113 : vector<4x1xf32>
    %c4_i32_36 = arith.constant 4 : i32
    %115 = vector.broadcast %c4_i32_36 : i32 to vector<4x1xi32>
    %116 = arith.cmpi slt, %112, %115 : vector<4x1xi32>
    %117 = arith.andi %114, %116 : vector<4x1xi1>
    %c0_37 = arith.constant 0 : index
    %c0_38 = arith.constant 0 : index
    %118 = vector.load %arg4[%c0_37, %c0_38] : memref<1x1xf32, #tpu.memory_space<vmem>>, vector<1x1xf32>
    %cst_39 = arith.constant 0.000000e+00 : f32
    %119 = vector.broadcast %cst_39 : f32 to vector<4x1xf32>
    %120 = arith.select %117, %106, %119 : vector<4x1xi1>, vector<4x1xf32>
    %cst_40 = arith.constant dense<0.000000e+00> : vector<1xf32>
    %121 = vector.multi_reduction <add>, %120, %cst_40 [0] : vector<4x1xf32> to vector<1xf32>
    %122 = vector.shape_cast %121 : vector<1xf32> to vector<1x1xf32>
    %123 = arith.addf %118, %122 : vector<1x1xf32>
    %c0_41 = arith.constant 0 : index
    %c0_42 = arith.constant 0 : index
    %124 = vector.load %arg4[%c0_41, %c0_42] : memref<1x1xf32, #tpu.memory_space<vmem>>, vector<1x1xf32>
    tpu.vector_store %arg4[%c0_41, %c0_42], %123 {strides = array<i32>} : memref<1x1xf32, #tpu.memory_space<vmem>>, vector<1x1xf32>,
    return
  }
  func.func @transform_0(%arg0: i32) -> (i32, i32) {
    %c0_i32 = arith.constant 0 : i32
    %c0_i32_0 = arith.constant 0 : i32
    return %arg0, %c0_i32 : i32, i32
  }
  func.func @transform_1(%arg0: i32) -> (i32, i32, i32) {
    %c0_i32 = arith.constant 0 : i32
    %c0_i32_0 = arith.constant 0 : i32
    %c0_i32_1 = arith.constant 0 : i32
    return %arg0, %c0_i32, %c0_i32_0 : i32, i32, i32
  }
  func.func @transform_2(%arg0: i32) -> (i32, i32, i32) {
    %c0_i32 = arith.constant 0 : i32
    %c0_i32_0 = arith.constant 0 : i32
    %c0_i32_1 = arith.constant 0 : i32
    return %arg0, %c0_i32, %c0_i32_0 : i32, i32, i32
  }
  func.func @transform_3(%arg0: i32) -> (i32, i32) {
    %c0_i32 = arith.constant 0 : i32
    %c0_i32_0 = arith.constant 0 : i32
    %c0_i32_1 = arith.constant 0 : i32
    return %c0_i32, %c0_i32_0 : i32, i32
  }
}

</mosaic_0001>

<llo_original>
// kernel: tpu_custom_call.1
$region0: #{tpu_custom_call.1}
  #allocation0 [shape = 'u32[]', space=smem, size = 0x4, offset = 0x4, fixed_abs, tag = 'smem constant byte address 0x4 - core index']
  #allocation1 [shape = 'u32[144,128]{1,0:T(1,128)}', space=vmem, size = 0x12000, scoped, tag = 'internal scratch']
  %s0 = inlined_call_operand.hbm [shape: f32[4,8], index: 0, kind: input, shape index: {}]
  %s1 = inlined_call_operand.hbm [shape: f32[4,8,32], index: 1, kind: input, shape index: {}]
  %s2 = inlined_call_operand.hbm [shape: f32[4,8,32], index: 2, kind: input, shape index: {}]
  %s3 = inlined_call_operand.hbm [shape: f32[1,1], index: 3, kind: output, shape index: {}]
  %s4 = sld [smem:[#allocation0]]
  $region38: #{tpu_custom_call.1} parent=0
    _
  %s6 = ssub.s32 1, %s4
  %s7 = scalar_select 0, %s6, %s4
  $region1: #{tpu_custom_call.1} parent=0
    #allocation2 [shape = 'u8[2048]{0}', space=vmem, size = 0x800, scoped, tag = 'input window, operand 0, single buffered']
    #allocation3 [shape = 's32[1]{0}', space=sflag, size = 0x4, scoped, tag = 'scoped memory for tpu_custom_call.1']
    #allocation4 [shape = 's32[1]{0}', space=sflag, size = 0x4, scoped, tag = 'scoped memory for tpu_custom_call.1']
    #allocation5 [shape = 'u8[16384]{0}', space=vmem, size = 0x4000, scoped, tag = 'input window, operand 1, single buffered']
    #allocation6 [shape = 's32[1]{0}', space=sflag, size = 0x4, scoped, tag = 'scoped memory for tpu_custom_call.1']
    #allocation7 [shape = 'u8[16384]{0}', space=vmem, size = 0x4000, scoped, tag = 'input window, operand 2, single buffered']
    #allocation8 [shape = 'u8[512]{0}', space=vmem, size = 0x400, scoped, tag = 'output window, operand 0, single buffered']
    %8 = vsyncpa [#allocation3], 0
    %9 = vsyncpa [#allocation6], 0
    %10 = vsyncpa [#allocation4], 0
    // Predicated region
    $region2: #{tpu_custom_call.1} parent=1 // pred_check
      _
    $region3: #{tpu_custom_call.1} parent=1 // pred_check_branch
      %12 = sbr.rel (0) target = $region5
    $region4: #{tpu_custom_call.1} parent=1 // pred_region
      %s14 = ssub.s32 64, 64
      %15 = vsyncadd [#allocation3], %s14
      %s17 = sshll.u32 [#allocation2], 4
      %s18 = int_to_ptr.vmem [resolvable:$true] %s17
      %20 = dma.hbm_to_vmem [thread:$0]  %s0, 64, %s18, [#allocation3]
    $region5: #{tpu_custom_call.1} parent=1 // pred_fallthru
      _
    // Predicated region
    $region6: #{tpu_custom_call.1} parent=1 // pred_check
      _
    $region7: #{tpu_custom_call.1} parent=1 // pred_check_branch
      %22 = sbr.rel (0) target = $region9
    $region8: #{tpu_custom_call.1} parent=1 // pred_region
      %s24 = ssub.s32 512, 512
      %25 = vsyncadd [#allocation6], %s24
      %s26 = sshll.u32 [#allocation5], 4
      %s27 = int_to_ptr.vmem [resolvable:$true] %s26
      %32 = dma.hbm_to_vmem [thread:$0]  %s1, 512, %s27, [#allocation6], 128, 128, 8
    $region9: #{tpu_custom_call.1} parent=1 // pred_fallthru
      _
    // Predicated region
    $region10: #{tpu_custom_call.1} parent=1 // pred_check
      _
    $region11: #{tpu_custom_call.1} parent=1 // pred_check_branch
      %34 = sbr.rel (0) target = $region13
    $region12: #{tpu_custom_call.1} parent=1 // pred_region
      %s36 = ssub.s32 512, 512
      %37 = vsyncadd [#allocation6], %s36
      %s38 = sshll.u32 [#allocation7], 4
      %s39 = int_to_ptr.vmem [resolvable:$true] %s38
      %44 = dma.hbm_to_vmem [thread:$0]  %s2, 512, %s39, [#allocation6], 128, 128, 8
    $region13: #{tpu_custom_call.1} parent=1 // pred_fallthru
      _
    // Predicated region
    $region14: #{tpu_custom_call.1} parent=1 // pred_check
      _
    $region15: #{tpu_custom_call.1} parent=1 // pred_check_branch
      %46 = sbr.rel (0) target = $region17
    $region16: #{tpu_custom_call.1} parent=1 // pred_region
      %47 = dma.done [#allocation3], 64
    $region17: #{tpu_custom_call.1} parent=1 // pred_fallthru
      _
    // Predicated region
    $region18: #{tpu_custom_call.1} parent=1 // pred_check
      _
    $region19: #{tpu_custom_call.1} parent=1 // pred_check_branch
      %49 = sbr.rel (0) target = $region21
    $region20: #{tpu_custom_call.1} parent=1 // pred_region
      %50 = dma.done [#allocation6], 512
    $region21: #{tpu_custom_call.1} parent=1 // pred_fallthru
      _
    // Predicated region
    $region22: #{tpu_custom_call.1} parent=1 // pred_check
      _
    $region23: #{tpu_custom_call.1} parent=1 // pred_check_branch
      %52 = sbr.rel (0) target = $region25
    $region24: #{tpu_custom_call.1} parent=1 // pred_region
      %53 = dma.done [#allocation6], 512
    $region25: #{tpu_custom_call.1} parent=1 // pred_fallthru
      _
    %p54 = scmp.eq.s32.totalorder 0, 0
    // Predicated region
    $region26: #{tpu_custom_call.1} parent=1 // pred_check
      %p55 = pneg %p54
    $region27: #{tpu_custom_call.1} parent=1 // pred_check_branch
      %57 = sbr.rel (%p55) target = $region29
    $region28: #{tpu_custom_call.1} parent=1 // pred_region
      %vm58 = vcmask 0
      %59 = vst.msk [vmem:[#allocation8] sm:$0x1] %vm58, 0.0
    $region29: #{tpu_custom_call.1} parent=1 // pred_fallthru
      _
    %v60 = vld [vmem:[#allocation2] sm:$0xf]
    %v61 = vld [vmem:[#allocation5] sm:$0xff]
    %v62 = vld [vmem:[#allocation5 + $0x8] sm:$0xff]
    %v63 = vld [vmem:[#allocation5 + $0x10] sm:$0xff]
    %v64 = vld [vmem:[#allocation5 + $0x18] sm:$0xff]
    %v65 = vlaneseq
    %v66 = vshrl.u32 %v65, 7
    %v67 = vsub.s32 0, %v66
    %v68 = vrot.slane %v60, %v67
    %70 = vbcast.lane.b32.xlu0 %v68, 256
    %v71 = vpop.permute.xlu0 %70
    %v72 = vlaneseq
    %v73 = vshrl.u32 %v72, 7
    %v74 = vsub.s32 1, %v73
    %v75 = vrot.slane %v60, %v74
    %77 = vbcast.lane.b32.xlu0 %v75, 256
    %v78 = vpop.permute.xlu0 %77
    %v79 = vlaneseq
    %v80 = vshrl.u32 %v79, 7
    %v81 = vsub.s32 2, %v80
    %v82 = vrot.slane %v60, %v81
    %84 = vbcast.lane.b32.xlu0 %v82, 256
    %v85 = vpop.permute.xlu0 %84
    %v86 = vlaneseq
    %v87 = vshrl.u32 %v86, 7
    %v88 = vsub.s32 3, %v87
    %v89 = vrot.slane %v60, %v88
    %91 = vbcast.lane.b32.xlu0 %v89, 256
    %v92 = vpop.permute.xlu0 %91
    %v93 = vmul.f32 %v61, %v71
    %v94 = vmul.f32 %v62, %v78
    %v95 = vmul.f32 %v63, %v85
    %v96 = vmul.f32 %v64, %v92
    %v97 = vld [vmem:[#allocation7] sm:$0xff]
    %v98 = vld [vmem:[#allocation7 + $0x8] sm:$0xff]
    %v99 = vld [vmem:[#allocation7 + $0x10] sm:$0xff]
    %v100 = vld [vmem:[#allocation7 + $0x18] sm:$0xff]
    %v101 = vmul.f32 %v97, %v71
    %v102 = vmul.f32 %v98, %v78
    %v103 = vmul.f32 %v99, %v85
    %v104 = vmul.f32 %v100, %v92
    %vm105 = vcmp.ne.f32.partialorder %v60, 0.0
    %v106 = vsel %vm105, 1, 0
    %v107 = vcvt.s32.f32 %v106
    %v108 = vlaneseq
    %v109 = vshrl.u32 %v108, 7
    %v110 = vlaneseq
    %v111 = vand.u32 %v110, 127
    %vm112 = vcmp.ne.s32.totalorder %v109, %v111
    %v113 = vsel %vm112, 1, 0
    %v114 = vcvt.s32.f32 %v113
    %v115 = vlaneseq
    %v116 = vshrl.u32 %v115, 7
    %v117 = vsub.s32 0, %v116
    %v118 = vrot.slane %v107, %v117
    %120 = vbcast.lane.b32.xlu0 %v118, 256
    %v121 = vpop.permute.xlu0 %120
    %v122 = vlaneseq
    %v123 = vshrl.u32 %v122, 7
    %v124 = vsub.s32 1, %v123
    %v125 = vrot.slane %v107, %v124
    %127 = vbcast.lane.b32.xlu0 %v125, 256
    %v128 = vpop.permute.xlu0 %127
    %v129 = vlaneseq
    %v130 = vshrl.u32 %v129, 7
    %v131 = vsub.s32 2, %v130
    %v132 = vrot.slane %v107, %v131
    %134 = vbcast.lane.b32.xlu0 %v132, 256
    %v135 = vpop.permute.xlu0 %134
    %v136 = vlaneseq
    %v137 = vshrl.u32 %v136, 7
    %v138 = vsub.s32 3, %v137
    %v139 = vrot.slane %v107, %v138
    %141 = vbcast.lane.b32.xlu0 %v139, 256
    %v142 = vpop.permute.xlu0 %141
    %v145 = vunpack.c.l.s4 1966171168
    %v146 = vunpack.c.0.s8 %v145
    %v147 = vlaneseq
    %v148 = vshrl.u32 %v147, 7
    %v149 = vsub.s32 %v146, %v148
    %v150 = vrot.slane %v107, %v149
    %v151 = vcombine.high %v150, %v150
    %v153 = vunpack.c.l.s4 1966171168
    %v154 = vunpack.c.0.s8 %v153
    %v155 = vlaneseq
    %v156 = vshrl.u32 %v155, 7
    %v157 = vsub.s32 %v154, %v156
    %v158 = vrot.slane %v150, %v157
    %v160 = vunpack.c.l.s4 1966171168
    %v161 = vunpack.c.0.s8 %v160
    %v162 = vlaneseq
    %v163 = vshrl.u32 %v162, 7
    %v164 = vsub.s32 %v161, %v163
    %v165 = vrot.slane %v151, %v164
    %v166 = vcombine.high %v158, %v158
    %v167 = vcombine.high %v165, %v165
    %v168 = vlaneseq
    %v169 = vshrl.u32 %v168, 7
    %v170 = vsub.s32 0, %v169
    %v171 = vrot.slane %v158, %v170
    %v172 = vlaneseq
    %v173 = vshrl.u32 %v172, 7
    %v174 = vsub.s32 0, %v173
    %v175 = vrot.slane %v165, %v174
    %v176 = vlaneseq
    %v177 = vshrl.u32 %v176, 7
    %v178 = vsub.s32 0, %v177
    %v179 = vrot.slane %v166, %v178
    %v180 = vlaneseq
    %v181 = vshrl.u32 %v180, 7
    %v182 = vsub.s32 0, %v181
    %v183 = vrot.slane %v167, %v182
    %v188 = vmul.f32 %v121, %v171
    %v189 = vmul.f32 %v128, %v175
    %v190 = vmul.f32 %v135, %v179
    %v191 = vmul.f32 %v142, %v183
    %v192 = vmul.f32 %v188, %v114
    %v193 = vmul.f32 %v189, %v114
    %v194 = vmul.f32 %v190, %v114
    %v195 = vmul.f32 %v191, %v114
    %vm196 = vcmask 261120
    %v198 = vsel %vm196, %v93, 0
    %200 = vmatprep.subr.mxu0 0.0
    %201 = vmatpush1.xpose.msra.mxu0 0.0
    %202 = vmatprep.subr.mxu0 0.0
    %203 = vmatpush1.xpose.msra.mxu0 0.0
    %204 = vmatprep.subr.mxu0 0.0
    %205 = vmatpush1.xpose.msra.mxu0 0.0
    %206 = vmatprep.subr.mxu0 0.0
    %207 = vmatpush1.xpose.msra.mxu0 0.0
    %208 = vmatprep.subr.mxu0 0.0
    %209 = vmatpush1.xpose.msra.mxu0 0.0
    %210 = vmatprep.subr.mxu0 0.0
    %211 = vmatpush1.xpose.msra.mxu0 0.0
    %212 = vmatprep.subr.mxu0 0.0
    %213 = vmatpush1.xpose.msra.mxu0 0.0
    %214 = vmatprep.subr.mxu0 0.0
    %215 = vmatpush1.xpose.msra.mxu0 0.0
    %216 = vmatprep.subr.mxu0 0.0
    %217 = vmatpush1.xpose.msra.mxu0 0.0
    %218 = vmatprep.subr.mxu0 0.0
    %219 = vmatpush1.xpose.msra.mxu0 0.0
    %220 = vmatprep.subr.mxu0 0.0
    %221 = vmatpush1.xpose.msra.mxu0 0.0
    %222 = vmatprep.subr.mxu0 0.0
    %223 = vmatpush1.xpose.msra.mxu0 0.0
    %224 = vmatprep.subr.mxu0 0.0
    %225 = vmatpush1.xpose.msra.mxu0 0.0
    %226 = vmatprep.subr.mxu0 0.0
    %227 = vmatpush1.xpose.msra.mxu0 0.0
    %228 = vmatprep.subr.mxu0 0.0
    %229 = vmatpush1.xpose.msra.mxu0 0.0
    %230 = vmatprep.subr.mxu0 0.0
    %231 = vmatpush1.xpose.msra.mxu0 %v198
    %232 = vmatprep.subr.mxu0 0.0
    %233 = vmatpush2.xpose.msra.mxu0 0.0
    %234 = vmatprep.subr.mxu0 0.0
    %235 = vmatpush2.xpose.msra.mxu0 0.0
    %236 = vmatprep.subr.mxu0 0.0
    %237 = vmatpush2.xpose.msra.mxu0 0.0
    %238 = vmatprep.subr.mxu0 0.0
    %239 = vmatpush2.xpose.msra.mxu0 0.0
    %240 = vmatprep.subr.mxu0 0.0
    %241 = vmatpush2.xpose.msra.mxu0 0.0
    %242 = vmatprep.subr.mxu0 0.0
    %243 = vmatpush2.xpose.msra.mxu0 0.0
    %244 = vmatprep.subr.mxu0 0.0
    %245 = vmatpush2.xpose.msra.mxu0 0.0
    %246 = vmatprep.subr.mxu0 0.0
    %247 = vmatpush2.xpose.msra.mxu0 0.0
    %248 = vmatprep.subr.mxu0 0.0
    %249 = vmatpush2.xpose.msra.mxu0 0.0
    %250 = vmatprep.subr.mxu0 0.0
    %251 = vmatpush2.xpose.msra.mxu0 0.0
    %252 = vmatprep.subr.mxu0 0.0
    %253 = vmatpush2.xpose.msra.mxu0 0.0
    %254 = vmatprep.subr.mxu0 0.0
    %255 = vmatpush2.xpose.msra.mxu0 0.0
    %256 = vmatprep.subr.mxu0 0.0
    %257 = vmatpush2.xpose.msra.mxu0 0.0
    %258 = vmatprep.subr.mxu0 0.0
    %259 = vmatpush2.xpose.msra.mxu0 0.0
    %260 = vmatprep.subr.mxu0 0.0
    %261 = vmatpush2.xpose.msra.mxu0 0.0
    %262 = vmatprep.subr.mxu0 0.0
    %263 = vmatpush2.xpose.msra.mxu0 0.0
    %264 = vmatprep.mubr.f32.mxu0 0.0
    %265 = vmatmul.mubr.f32.gmra.mxu0 %v198
    %v266 = vpop.f32.mrf.mxu0
    %v267 = vadd.f32 0.0, %v266
    %v268 = vpop.f32.mrf.mxu0
    %269 = vdwg.mxu0
    %v271 = vsel %vm196, %v94, 0
    %273 = vmatprep.subr.mxu0 0.0
    %274 = vmatpush1.xpose.msra.mxu0 0.0
    %275 = vmatprep.subr.mxu0 0.0
    %276 = vmatpush1.xpose.msra.mxu0 0.0
    %277 = vmatprep.subr.mxu0 0.0
    %278 = vmatpush1.xpose.msra.mxu0 0.0
    %279 = vmatprep.subr.mxu0 0.0
    %280 = vmatpush1.xpose.msra.mxu0 0.0
    %281 = vmatprep.subr.mxu0 0.0
    %282 = vmatpush1.xpose.msra.mxu0 0.0
    %283 = vmatprep.subr.mxu0 0.0
    %284 = vmatpush1.xpose.msra.mxu0 0.0
    %285 = vmatprep.subr.mxu0 0.0
    %286 = vmatpush1.xpose.msra.mxu0 0.0
    %287 = vmatprep.subr.mxu0 0.0
    %288 = vmatpush1.xpose.msra.mxu0 0.0
    %289 = vmatprep.subr.mxu0 0.0
    %290 = vmatpush1.xpose.msra.mxu0 0.0
    %291 = vmatprep.subr.mxu0 0.0
    %292 = vmatpush1.xpose.msra.mxu0 0.0
    %293 = vmatprep.subr.mxu0 0.0
    %294 = vmatpush1.xpose.msra.mxu0 0.0
    %295 = vmatprep.subr.mxu0 0.0
    %296 = vmatpush1.xpose.msra.mxu0 0.0
    %297 = vmatprep.subr.mxu0 0.0
    %298 = vmatpush1.xpose.msra.mxu0 0.0
    %299 = vmatprep.subr.mxu0 0.0
    %300 = vmatpush1.xpose.msra.mxu0 0.0
    %301 = vmatprep.subr.mxu0 0.0
    %302 = vmatpush1.xpose.msra.mxu0 0.0
    %303 = vmatprep.subr.mxu0 0.0
    %304 = vmatpush1.xpose.msra.mxu0 %v271
    %305 = vmatprep.subr.mxu0 0.0
    %306 = vmatpush2.xpose.msra.mxu0 0.0
    %307 = vmatprep.subr.mxu0 0.0
    %308 = vmatpush2.xpose.msra.mxu0 0.0
    %309 = vmatprep.subr.mxu0 0.0
    %310 = vmatpush2.xpose.msra.mxu0 0.0
    %311 = vmatprep.subr.mxu0 0.0
    %312 = vmatpush2.xpose.msra.mxu0 0.0
    %313 = vmatprep.subr.mxu0 0.0
    %314 = vmatpush2.xpose.msra.mxu0 0.0
    %315 = vmatprep.subr.mxu0 0.0
    %316 = vmatpush2.xpose.msra.mxu0 0.0
    %317 = vmatprep.subr.mxu0 0.0
    %318 = vmatpush2.xpose.msra.mxu0 0.0
    %319 = vmatprep.subr.mxu0 0.0
    %320 = vmatpush2.xpose.msra.mxu0 0.0
    %321 = vmatprep.subr.mxu0 0.0
    %322 = vmatpush2.xpose.msra.mxu0 0.0
    %323 = vmatprep.subr.mxu0 0.0
    %324 = vmatpush2.xpose.msra.mxu0 0.0
    %325 = vmatprep.subr.mxu0 0.0
    %326 = vmatpush2.xpose.msra.mxu0 0.0
    %327 = vmatprep.subr.mxu0 0.0
    %328 = vmatpush2.xpose.msra.mxu0 0.0
    %329 = vmatprep.subr.mxu0 0.0
    %330 = vmatpush2.xpose.msra.mxu0 0.0
    %331 = vmatprep.subr.mxu0 0.0
    %332 = vmatpush2.xpose.msra.mxu0 0.0
    %333 = vmatprep.subr.mxu0 0.0
    %334 = vmatpush2.xpose.msra.mxu0 0.0
    %335 = vmatprep.subr.mxu0 0.0
    %336 = vmatpush2.xpose.msra.mxu0 0.0
    %337 = vmatprep.mubr.f32.mxu0 0.0
    %338 = vmatmul.mubr.f32.gmra.mxu0 %v271
    %v339 = vpop.f32.mrf.mxu0
    %v340 = vadd.f32 0.0, %v339
    %v341 = vpop.f32.mrf.mxu0
    %342 = vdwg.mxu0
    %v344 = vsel %vm196, %v95, 0
    %346 = vmatprep.subr.mxu0 0.0
    %347 = vmatpush1.xpose.msra.mxu0 0.0
    %348 = vmatprep.subr.mxu0 0.0
    %349 = vmatpush1.xpose.msra.mxu0 0.0
    %350 = vmatprep.subr.mxu0 0.0
    %351 = vmatpush1.xpose.msra.mxu0 0.0
    %352 = vmatprep.subr.mxu0 0.0
    %353 = vmatpush1.xpose.msra.mxu0 0.0
    %354 = vmatprep.subr.mxu0 0.0
    %355 = vmatpush1.xpose.msra.mxu0 0.0
    %356 = vmatprep.subr.mxu0 0.0
    %357 = vmatpush1.xpose.msra.mxu0 0.0
    %358 = vmatprep.subr.mxu0 0.0
    %359 = vmatpush1.xpose.msra.mxu0 0.0
    %360 = vmatprep.subr.mxu0 0.0
    %361 = vmatpush1.xpose.msra.mxu0 0.0
    %362 = vmatprep.subr.mxu0 0.0
    %363 = vmatpush1.xpose.msra.mxu0 0.0
    %364 = vmatprep.subr.mxu0 0.0
    %365 = vmatpush1.xpose.msra.mxu0 0.0
    %366 = vmatprep.subr.mxu0 0.0
    %367 = vmatpush1.xpose.msra.mxu0 0.0
    %368 = vmatprep.subr.mxu0 0.0
    %369 = vmatpush1.xpose.msra.mxu0 0.0
    %370 = vmatprep.subr.mxu0 0.0
    %371 = vmatpush1.xpose.msra.mxu0 0.0
    %372 = vmatprep.subr.mxu0 0.0
    %373 = vmatpush1.xpose.msra.mxu0 0.0
    %374 = vmatprep.subr.mxu0 0.0
    %375 = vmatpush1.xpose.msra.mxu0 0.0
    %376 = vmatprep.subr.mxu0 0.0
    %377 = vmatpush1.xpose.msra.mxu0 %v344
    %378 = vmatprep.subr.mxu0 0.0
    %379 = vmatpush2.xpose.msra.mxu0 0.0
    %380 = vmatprep.subr.mxu0 0.0
    %381 = vmatpush2.xpose.msra.mxu0 0.0
    %382 = vmatprep.subr.mxu0 0.0
    %383 = vmatpush2.xpose.msra.mxu0 0.0
    %384 = vmatprep.subr.mxu0 0.0
    %385 = vmatpush2.xpose.msra.mxu0 0.0
    %386 = vmatprep.subr.mxu0 0.0
    %387 = vmatpush2.xpose.msra.mxu0 0.0
    %388 = vmatprep.subr.mxu0 0.0
    %389 = vmatpush2.xpose.msra.mxu0 0.0
    %390 = vmatprep.subr.mxu0 0.0
    %391 = vmatpush2.xpose.msra.mxu0 0.0
    %392 = vmatprep.subr.mxu0 0.0
    %393 = vmatpush2.xpose.msra.mxu0 0.0
    %394 = vmatprep.subr.mxu0 0.0
    %395 = vmatpush2.xpose.msra.mxu0 0.0
    %396 = vmatprep.subr.mxu0 0.0
    %397 = vmatpush2.xpose.msra.mxu0 0.0
    %398 = vmatprep.subr.mxu0 0.0
    %399 = vmatpush2.xpose.msra.mxu0 0.0
    %400 = vmatprep.subr.mxu0 0.0
    %401 = vmatpush2.xpose.msra.mxu0 0.0
    %402 = vmatprep.subr.mxu0 0.0
    %403 = vmatpush2.xpose.msra.mxu0 0.0
    %404 = vmatprep.subr.mxu0 0.0
    %405 = vmatpush2.xpose.msra.mxu0 0.0
    %406 = vmatprep.subr.mxu0 0.0
    %407 = vmatpush2.xpose.msra.mxu0 0.0
    %408 = vmatprep.subr.mxu0 0.0
    %409 = vmatpush2.xpose.msra.mxu0 0.0
    %410 = vmatprep.mubr.f32.mxu0 0.0
    %411 = vmatmul.mubr.f32.gmra.mxu0 %v344
    %v412 = vpop.f32.mrf.mxu0
    %v413 = vadd.f32 0.0, %v412
    %v414 = vpop.f32.mrf.mxu0
    %415 = vdwg.mxu0
    %v417 = vsel %vm196, %v96, 0
    %419 = vmatprep.subr.mxu0 0.0
    %420 = vmatpush1.xpose.msra.mxu0 0.0
    %421 = vmatprep.subr.mxu0 0.0
    %422 = vmatpush1.xpose.msra.mxu0 0.0
    %423 = vmatprep.subr.mxu0 0.0
    %424 = vmatpush1.xpose.msra.mxu0 0.0
    %425 = vmatprep.subr.mxu0 0.0
    %426 = vmatpush1.xpose.msra.mxu0 0.0
    %427 = vmatprep.subr.mxu0 0.0
    %428 = vmatpush1.xpose.msra.mxu0 0.0
    %429 = vmatprep.subr.mxu0 0.0
    %430 = vmatpush1.xpose.msra.mxu0 0.0
    %431 = vmatprep.subr.mxu0 0.0
    %432 = vmatpush1.xpose.msra.mxu0 0.0
    %433 = vmatprep.subr.mxu0 0.0
    %434 = vmatpush1.xpose.msra.mxu0 0.0
    %435 = vmatprep.subr.mxu0 0.0
    %436 = vmatpush1.xpose.msra.mxu0 0.0
    %437 = vmatprep.subr.mxu0 0.0
    %438 = vmatpush1.xpose.msra.mxu0 0.0
    %439 = vmatprep.subr.mxu0 0.0
    %440 = vmatpush1.xpose.msra.mxu0 0.0
    %441 = vmatprep.subr.mxu0 0.0
    %442 = vmatpush1.xpose.msra.mxu0 0.0
    %443 = vmatprep.subr.mxu0 0.0
    %444 = vmatpush1.xpose.msra.mxu0 0.0
    %445 = vmatprep.subr.mxu0 0.0
    %446 = vmatpush1.xpose.msra.mxu0 0.0
    %447 = vmatprep.subr.mxu0 0.0
    %448 = vmatpush1.xpose.msra.mxu0 0.0
    %449 = vmatprep.subr.mxu0 0.0
    %450 = vmatpush1.xpose.msra.mxu0 %v417
    %451 = vmatprep.subr.mxu0 0.0
    %452 = vmatpush2.xpose.msra.mxu0 0.0
    %453 = vmatprep.subr.mxu0 0.0
    %454 = vmatpush2.xpose.msra.mxu0 0.0
    %455 = vmatprep.subr.mxu0 0.0
    %456 = vmatpush2.xpose.msra.mxu0 0.0
    %457 = vmatprep.subr.mxu0 0.0
    %458 = vmatpush2.xpose.msra.mxu0 0.0
    %459 = vmatprep.subr.mxu0 0.0
    %460 = vmatpush2.xpose.msra.mxu0 0.0
    %461 = vmatprep.subr.mxu0 0.0
    %462 = vmatpush2.xpose.msra.mxu0 0.0
    %463 = vmatprep.subr.mxu0 0.0
    %464 = vmatpush2.xpose.msra.mxu0 0.0
    %465 = vmatprep.subr.mxu0 0.0
    %466 = vmatpush2.xpose.msra.mxu0 0.0
    %467 = vmatprep.subr.mxu0 0.0
    %468 = vmatpush2.xpose.msra.mxu0 0.0
    %469 = vmatprep.subr.mxu0 0.0
    %470 = vmatpush2.xpose.msra.mxu0 0.0
    %471 = vmatprep.subr.mxu0 0.0
    %472 = vmatpush2.xpose.msra.mxu0 0.0
    %473 = vmatprep.subr.mxu0 0.0
    %474 = vmatpush2.xpose.msra.mxu0 0.0
    %475 = vmatprep.subr.mxu0 0.0
    %476 = vmatpush2.xpose.msra.mxu0 0.0
    %477 = vmatprep.subr.mxu0 0.0
    %478 = vmatpush2.xpose.msra.mxu0 0.0
    %479 = vmatprep.subr.mxu0 0.0
    %480 = vmatpush2.xpose.msra.mxu0 0.0
    %481 = vmatprep.subr.mxu0 0.0
    %482 = vmatpush2.xpose.msra.mxu0 0.0
    %483 = vmatprep.mubr.f32.mxu0 0.0
    %484 = vmatmul.mubr.f32.gmra.mxu0 %v417
    %v485 = vpop.f32.mrf.mxu0
    %v486 = vadd.f32 0.0, %v485
    %v487 = vpop.f32.mrf.mxu0
    %488 = vdwg.mxu0
    %v489 = vmul.f32 %v93, %v93
    %v490 = vmul.f32 %v94, %v94
    %v491 = vmul.f32 %v95, %v95
    %v492 = vmul.f32 %v96, %v96
    %v493 = vsel %vm196, %v489, 0.0
    %494 = vadd.xlane.f32.xlu0 %v493
    %v495 = vpop.xlane.xlu0 %494
    %v496 = vsel %vm196, %v490, 0.0
    %497 = vadd.xlane.f32.xlu0 %v496
    %v498 = vpop.xlane.xlu0 %497
    %v499 = vsel %vm196, %v491, 0.0
    %500 = vadd.xlane.f32.xlu0 %v499
    %v501 = vpop.xlane.xlu0 %500
    %v502 = vsel %vm196, %v492, 0.0
    %503 = vadd.xlane.f32.xlu0 %v502
    %v504 = vpop.xlane.xlu0 %503
    %v509 = vlaneseq
    %v510 = vshrl.u32 %v509, 7
    %v511 = vsub.s32 %v111, %v510
    %v512 = vrot.slane %v495, %v511
    %v513 = vlaneseq
    %v514 = vshrl.u32 %v513, 7
    %v515 = vsub.s32 %v111, %v514
    %v516 = vrot.slane %v498, %v515
    %v517 = vlaneseq
    %v518 = vshrl.u32 %v517, 7
    %v519 = vsub.s32 %v111, %v518
    %v520 = vrot.slane %v501, %v519
    %v521 = vlaneseq
    %v522 = vshrl.u32 %v521, 7
    %v523 = vsub.s32 %v111, %v522
    %v524 = vrot.slane %v504, %v523
    %vm525 = vcmask 1041409
    %vm526 = vcmask 1042434
    %v527 = vsel %vm526, %v512, %v512
    %vm528 = vcmask 1043459
    %v529 = vsel %vm528, %v512, %v527
    %vm530 = vcmask 1044484
    %v531 = vsel %vm530, %v512, %v529
    %vm532 = vcmask 1045509
    %v533 = vsel %vm532, %v512, %v531
    %vm534 = vcmask 1046534
    %v535 = vsel %vm534, %v512, %v533
    %vm536 = vcmask 1047559
    %v537 = vsel %vm536, %v512, %v535
    %v538 = vsel %vm526, %v516, %v516
    %v539 = vsel %vm528, %v516, %v538
    %v540 = vsel %vm530, %v516, %v539
    %v541 = vsel %vm532, %v516, %v540
    %v542 = vsel %vm534, %v516, %v541
    %v543 = vsel %vm536, %v516, %v542
    %v544 = vsel %vm526, %v520, %v520
    %v545 = vsel %vm528, %v520, %v544
    %v546 = vsel %vm530, %v520, %v545
    %v547 = vsel %vm532, %v520, %v546
    %v548 = vsel %vm534, %v520, %v547
    %v549 = vsel %vm536, %v520, %v548
    %v550 = vsel %vm526, %v524, %v524
    %v551 = vsel %vm528, %v524, %v550
    %v552 = vsel %vm530, %v524, %v551
    %v553 = vsel %vm532, %v524, %v552
    %v554 = vsel %vm534, %v524, %v553
    %v555 = vsel %vm536, %v524, %v554
    %v560 = vadd.f32 %v495, %v537
    %v561 = vadd.f32 %v498, %v543
    %v562 = vadd.f32 %v501, %v549
    %v563 = vadd.f32 %v504, %v555
    %v564 = vmul.f32 %v267, 2.0
    %v565 = vmul.f32 %v340, 2.0
    %v566 = vmul.f32 %v413, 2.0
    %v567 = vmul.f32 %v486, 2.0
    %v568 = vsub.f32 %v560, %v564
    %v569 = vsub.f32 %v561, %v565
    %v570 = vsub.f32 %v562, %v566
    %v571 = vsub.f32 %v563, %v567
    %v572 = vmax.f32 %v568, 1e-12
    %v573 = vmax.f32 %v569, 1e-12
    %v574 = vmax.f32 %v570, 1e-12
    %v575 = vmax.f32 %v571, 1e-12
    %v576 = vrsqrt.pop %v572
    %v577 = vmul.f32 %v572, %v576
    %vm578 = vcmp.eq.f32.partialorder %v572, inf
    %v579 = vsel %vm578, %v572, %v577
    %vm580 = vcmp.eq.f32.partialorder %v572, 0.0
    %v581 = vand.u32 %v572, 2147483648
    %v582 = vsel %vm580, %v581, %v579
    %v583 = vrsqrt.pop %v573
    %v584 = vmul.f32 %v573, %v583
    %vm585 = vcmp.eq.f32.partialorder %v573, inf
    %v586 = vsel %vm585, %v573, %v584
    %vm587 = vcmp.eq.f32.partialorder %v573, 0.0
    %v588 = vand.u32 %v573, 2147483648
    %v589 = vsel %vm587, %v588, %v586
    %v590 = vrsqrt.pop %v574
    %v591 = vmul.f32 %v574, %v590
    %vm592 = vcmp.eq.f32.partialorder %v574, inf
    %v593 = vsel %vm592, %v574, %v591
    %vm594 = vcmp.eq.f32.partialorder %v574, 0.0
    %v595 = vand.u32 %v574, 2147483648
    %v596 = vsel %vm594, %v595, %v593
    %v597 = vrsqrt.pop %v575
    %v598 = vmul.f32 %v575, %v597
    %vm599 = vcmp.eq.f32.partialorder %v575, inf
    %v600 = vsel %vm599, %v575, %v598
    %vm601 = vcmp.eq.f32.partialorder %v575, 0.0
    %v602 = vand.u32 %v575, 2147483648
    %v603 = vsel %vm601, %v602, %v600
    %v604 = vmul.f32 %v582, %v192
    %v605 = vmul.f32 %v589, %v193
    %v606 = vmul.f32 %v596, %v194
    %v607 = vmul.f32 %v603, %v195
    %v609 = vsel %vm196, %v101, 0
    %611 = vmatprep.subr.mxu0 0.0
    %612 = vmatpush1.xpose.msra.mxu0 0.0
    %613 = vmatprep.subr.mxu0 0.0
    %614 = vmatpush1.xpose.msra.mxu0 0.0
    %615 = vmatprep.subr.mxu0 0.0
    %616 = vmatpush1.xpose.msra.mxu0 0.0
    %617 = vmatprep.subr.mxu0 0.0
    %618 = vmatpush1.xpose.msra.mxu0 0.0
    %619 = vmatprep.subr.mxu0 0.0
    %620 = vmatpush1.xpose.msra.mxu0 0.0
    %621 = vmatprep.subr.mxu0 0.0
    %622 = vmatpush1.xpose.msra.mxu0 0.0
    %623 = vmatprep.subr.mxu0 0.0
    %624 = vmatpush1.xpose.msra.mxu0 0.0
    %625 = vmatprep.subr.mxu0 0.0
    %626 = vmatpush1.xpose.msra.mxu0 0.0
    %627 = vmatprep.subr.mxu0 0.0
    %628 = vmatpush1.xpose.msra.mxu0 0.0
    %629 = vmatprep.subr.mxu0 0.0
    %630 = vmatpush1.xpose.msra.mxu0 0.0
    %631 = vmatprep.subr.mxu0 0.0
    %632 = vmatpush1.xpose.msra.mxu0 0.0
    %633 = vmatprep.subr.mxu0 0.0
    %634 = vmatpush1.xpose.msra.mxu0 0.0
    %635 = vmatprep.subr.mxu0 0.0
    %636 = vmatpush1.xpose.msra.mxu0 0.0
    %637 = vmatprep.subr.mxu0 0.0
    %638 = vmatpush1.xpose.msra.mxu0 0.0
    %639 = vmatprep.subr.mxu0 0.0
    %640 = vmatpush1.xpose.msra.mxu0 0.0
    %641 = vmatprep.subr.mxu0 0.0
    %642 = vmatpush1.xpose.msra.mxu0 %v609
    %643 = vmatprep.subr.mxu0 0.0
    %644 = vmatpush2.xpose.msra.mxu0 0.0
    %645 = vmatprep.subr.mxu0 0.0
    %646 = vmatpush2.xpose.msra.mxu0 0.0
    %647 = vmatprep.subr.mxu0 0.0
    %648 = vmatpush2.xpose.msra.mxu0 0.0
    %649 = vmatprep.subr.mxu0 0.0
    %650 = vmatpush2.xpose.msra.mxu0 0.0
    %651 = vmatprep.subr.mxu0 0.0
    %652 = vmatpush2.xpose.msra.mxu0 0.0
    %653 = vmatprep.subr.mxu0 0.0
    %654 = vmatpush2.xpose.msra.mxu0 0.0
    %655 = vmatprep.subr.mxu0 0.0
    %656 = vmatpush2.xpose.msra.mxu0 0.0
    %657 = vmatprep.subr.mxu0 0.0
    %658 = vmatpush2.xpose.msra.mxu0 0.0
    %659 = vmatprep.subr.mxu0 0.0
    %660 = vmatpush2.xpose.msra.mxu0 0.0
    %661 = vmatprep.subr.mxu0 0.0
    %662 = vmatpush2.xpose.msra.mxu0 0.0
    %663 = vmatprep.subr.mxu0 0.0
    %664 = vmatpush2.xpose.msra.mxu0 0.0
    %665 = vmatprep.subr.mxu0 0.0
    %666 = vmatpush2.xpose.msra.mxu0 0.0
    %667 = vmatprep.subr.mxu0 0.0
    %668 = vmatpush2.xpose.msra.mxu0 0.0
    %669 = vmatprep.subr.mxu0 0.0
    %670 = vmatpush2.xpose.msra.mxu0 0.0
    %671 = vmatprep.subr.mxu0 0.0
    %672 = vmatpush2.xpose.msra.mxu0 0.0
    %673 = vmatprep.subr.mxu0 0.0
    %674 = vmatpush2.xpose.msra.mxu0 0.0
    %675 = vmatprep.mubr.f32.mxu0 0.0
    %676 = vmatmul.mubr.f32.gmra.mxu0 %v609
    %v677 = vpop.f32.mrf.mxu0
    %v678 = vadd.f32 0.0, %v677
    %v679 = vpop.f32.mrf.mxu0
    %680 = vdwg.mxu0
    %v682 = vsel %vm196, %v102, 0
    %684 = vmatprep.subr.mxu0 0.0
    %685 = vmatpush1.xpose.msra.mxu0 0.0
    %686 = vmatprep.subr.mxu0 0.0
    %687 = vmatpush1.xpose.msra.mxu0 0.0
    %688 = vmatprep.subr.mxu0 0.0
    %689 = vmatpush1.xpose.msra.mxu0 0.0
    %690 = vmatprep.subr.mxu0 0.0
    %691 = vmatpush1.xpose.msra.mxu0 0.0
    %692 = vmatprep.subr.mxu0 0.0
    %693 = vmatpush1.xpose.msra.mxu0 0.0
    %694 = vmatprep.subr.mxu0 0.0
    %695 = vmatpush1.xpose.msra.mxu0 0.0
    %696 = vmatprep.subr.mxu0 0.0
    %697 = vmatpush1.xpose.msra.mxu0 0.0
    %698 = vmatprep.subr.mxu0 0.0
    %699 = vmatpush1.xpose.msra.mxu0 0.0
    %700 = vmatprep.subr.mxu0 0.0
    %701 = vmatpush1.xpose.msra.mxu0 0.0
    %702 = vmatprep.subr.mxu0 0.0
    %703 = vmatpush1.xpose.msra.mxu0 0.0
    %704 = vmatprep.subr.mxu0 0.0
    %705 = vmatpush1.xpose.msra.mxu0 0.0
    %706 = vmatprep.subr.mxu0 0.0
    %707 = vmatpush1.xpose.msra.mxu0 0.0
    %708 = vmatprep.subr.mxu0 0.0
    %709 = vmatpush1.xpose.msra.mxu0 0.0
    %710 = vmatprep.subr.mxu0 0.0
    %711 = vmatpush1.xpose.msra.mxu0 0.0
    %712 = vmatprep.subr.mxu0 0.0
    %713 = vmatpush1.xpose.msra.mxu0 0.0
    %714 = vmatprep.subr.mxu0 0.0
    %715 = vmatpush1.xpose.msra.mxu0 %v682
    %716 = vmatprep.subr.mxu0 0.0
    %717 = vmatpush2.xpose.msra.mxu0 0.0
    %718 = vmatprep.subr.mxu0 0.0
    %719 = vmatpush2.xpose.msra.mxu0 0.0
    %720 = vmatprep.subr.mxu0 0.0
    %721 = vmatpush2.xpose.msra.mxu0 0.0
    %722 = vmatprep.subr.mxu0 0.0
    %723 = vmatpush2.xpose.msra.mxu0 0.0
    %724 = vmatprep.subr.mxu0 0.0
    %725 = vmatpush2.xpose.msra.mxu0 0.0
    %726 = vmatprep.subr.mxu0 0.0
    %727 = vmatpush2.xpose.msra.mxu0 0.0
    %728 = vmatprep.subr.mxu0 0.0
    %729 = vmatpush2.xpose.msra.mxu0 0.0
    %730 = vmatprep.subr.mxu0 0.0
    %731 = vmatpush2.xpose.msra.mxu0 0.0
    %732 = vmatprep.subr.mxu0 0.0
    %733 = vmatpush2.xpose.msra.mxu0 0.0
    %734 = vmatprep.subr.mxu0 0.0
    %735 = vmatpush2.xpose.msra.mxu0 0.0
    %736 = vmatprep.subr.mxu0 0.0
    %737 = vmatpush2.xpose.msra.mxu0 0.0
    %738 = vmatprep.subr.mxu0 0.0
    %739 = vmatpush2.xpose.msra.mxu0 0.0
    %740 = vmatprep.subr.mxu0 0.0
    %741 = vmatpush2.xpose.msra.mxu0 0.0
    %742 = vmatprep.subr.mxu0 0.0
    %743 = vmatpush2.xpose.msra.mxu0 0.0
    %744 = vmatprep.subr.mxu0 0.0
    %745 = vmatpush2.xpose.msra.mxu0 0.0
    %746 = vmatprep.subr.mxu0 0.0
    %747 = vmatpush2.xpose.msra.mxu0 0.0
    %748 = vmatprep.mubr.f32.mxu0 0.0
    %749 = vmatmul.mubr.f32.gmra.mxu0 %v682
    %v750 = vpop.f32.mrf.mxu0
    %v751 = vadd.f32 0.0, %v750
    %v752 = vpop.f32.mrf.mxu0
    %753 = vdwg.mxu0
    %v755 = vsel %vm196, %v103, 0
    %757 = vmatprep.subr.mxu0 0.0
    %758 = vmatpush1.xpose.msra.mxu0 0.0
    %759 = vmatprep.subr.mxu0 0.0
    %760 = vmatpush1.xpose.msra.mxu0 0.0
    %761 = vmatprep.subr.mxu0 0.0
    %762 = vmatpush1.xpose.msra.mxu0 0.0
    %763 = vmatprep.subr.mxu0 0.0
    %764 = vmatpush1.xpose.msra.mxu0 0.0
    %765 = vmatprep.subr.mxu0 0.0
    %766 = vmatpush1.xpose.msra.mxu0 0.0
    %767 = vmatprep.subr.mxu0 0.0
    %768 = vmatpush1.xpose.msra.mxu0 0.0
    %769 = vmatprep.subr.mxu0 0.0
    %770 = vmatpush1.xpose.msra.mxu0 0.0
    %771 = vmatprep.subr.mxu0 0.0
    %772 = vmatpush1.xpose.msra.mxu0 0.0
    %773 = vmatprep.subr.mxu0 0.0
    %774 = vmatpush1.xpose.msra.mxu0 0.0
    %775 = vmatprep.subr.mxu0 0.0
    %776 = vmatpush1.xpose.msra.mxu0 0.0
    %777 = vmatprep.subr.mxu0 0.0
    %778 = vmatpush1.xpose.msra.mxu0 0.0
    %779 = vmatprep.subr.mxu0 0.0
    %780 = vmatpush1.xpose.msra.mxu0 0.0
    %781 = vmatprep.subr.mxu0 0.0
    %782 = vmatpush1.xpose.msra.mxu0 0.0
    %783 = vmatprep.subr.mxu0 0.0
    %784 = vmatpush1.xpose.msra.mxu0 0.0
    %785 = vmatprep.subr.mxu0 0.0
    %786 = vmatpush1.xpose.msra.mxu0 0.0
    %787 = vmatprep.subr.mxu0 0.0
    %788 = vmatpush1.xpose.msra.mxu0 %v755
    %789 = vmatprep.subr.mxu0 0.0
    %790 = vmatpush2.xpose.msra.mxu0 0.0
    %791 = vmatprep.subr.mxu0 0.0
    %792 = vmatpush2.xpose.msra.mxu0 0.0
    %793 = vmatprep.subr.mxu0 0.0
    %794 = vmatpush2.xpose.msra.mxu0 0.0
    %795 = vmatprep.subr.mxu0 0.0
    %796 = vmatpush2.xpose.msra.mxu0 0.0
    %797 = vmatprep.subr.mxu0 0.0
    %798 = vmatpush2.xpose.msra.mxu0 0.0
    %799 = vmatprep.subr.mxu0 0.0
    %800 = vmatpush2.xpose.msra.mxu0 0.0
    %801 = vmatprep.subr.mxu0 0.0
    %802 = vmatpush2.xpose.msra.mxu0 0.0
    %803 = vmatprep.subr.mxu0 0.0
    %804 = vmatpush2.xpose.msra.mxu0 0.0
    %805 = vmatprep.subr.mxu0 0.0
    %806 = vmatpush2.xpose.msra.mxu0 0.0
    %807 = vmatprep.subr.mxu0 0.0
    %808 = vmatpush2.xpose.msra.mxu0 0.0
    %809 = vmatprep.subr.mxu0 0.0
    %810 = vmatpush2.xpose.msra.mxu0 0.0
    %811 = vmatprep.subr.mxu0 0.0
    %812 = vmatpush2.xpose.msra.mxu0 0.0
    %813 = vmatprep.subr.mxu0 0.0
    %814 = vmatpush2.xpose.msra.mxu0 0.0
    %815 = vmatprep.subr.mxu0 0.0
    %816 = vmatpush2.xpose.msra.mxu0 0.0
    %817 = vmatprep.subr.mxu0 0.0
    %818 = vmatpush2.xpose.msra.mxu0 0.0
    %819 = vmatprep.subr.mxu0 0.0
    %820 = vmatpush2.xpose.msra.mxu0 0.0
    %821 = vmatprep.mubr.f32.mxu0 0.0
    %822 = vmatmul.mubr.f32.gmra.mxu0 %v755
    %v823 = vpop.f32.mrf.mxu0
    %v824 = vadd.f32 0.0, %v823
    %v825 = vpop.f32.mrf.mxu0
    %826 = vdwg.mxu0
    %v828 = vsel %vm196, %v104, 0
    %830 = vmatprep.subr.mxu0 0.0
    %831 = vmatpush1.xpose.msra.mxu0 0.0
    %832 = vmatprep.subr.mxu0 0.0
    %833 = vmatpush1.xpose.msra.mxu0 0.0
    %834 = vmatprep.subr.mxu0 0.0
    %835 = vmatpush1.xpose.msra.mxu0 0.0
    %836 = vmatprep.subr.mxu0 0.0
    %837 = vmatpush1.xpose.msra.mxu0 0.0
    %838 = vmatprep.subr.mxu0 0.0
    %839 = vmatpush1.xpose.msra.mxu0 0.0
    %840 = vmatprep.subr.mxu0 0.0
    %841 = vmatpush1.xpose.msra.mxu0 0.0
    %842 = vmatprep.subr.mxu0 0.0
    %843 = vmatpush1.xpose.msra.mxu0 0.0
    %844 = vmatprep.subr.mxu0 0.0
    %845 = vmatpush1.xpose.msra.mxu0 0.0
    %846 = vmatprep.subr.mxu0 0.0
    %847 = vmatpush1.xpose.msra.mxu0 0.0
    %848 = vmatprep.subr.mxu0 0.0
    %849 = vmatpush1.xpose.msra.mxu0 0.0
    %850 = vmatprep.subr.mxu0 0.0
    %851 = vmatpush1.xpose.msra.mxu0 0.0
    %852 = vmatprep.subr.mxu0 0.0
    %853 = vmatpush1.xpose.msra.mxu0 0.0
    %854 = vmatprep.subr.mxu0 0.0
    %855 = vmatpush1.xpose.msra.mxu0 0.0
    %856 = vmatprep.subr.mxu0 0.0
    %857 = vmatpush1.xpose.msra.mxu0 0.0
    %858 = vmatprep.subr.mxu0 0.0
    %859 = vmatpush1.xpose.msra.mxu0 0.0
    %860 = vmatprep.subr.mxu0 0.0
    %861 = vmatpush1.xpose.msra.mxu0 %v828
    %862 = vmatprep.subr.mxu0 0.0
    %863 = vmatpush2.xpose.msra.mxu0 0.0
    %864 = vmatprep.subr.mxu0 0.0
    %865 = vmatpush2.xpose.msra.mxu0 0.0
    %866 = vmatprep.subr.mxu0 0.0
    %867 = vmatpush2.xpose.msra.mxu0 0.0
    %868 = vmatprep.subr.mxu0 0.0
    %869 = vmatpush2.xpose.msra.mxu0 0.0
    %870 = vmatprep.subr.mxu0 0.0
    %871 = vmatpush2.xpose.msra.mxu0 0.0
    %872 = vmatprep.subr.mxu0 0.0
    %873 = vmatpush2.xpose.msra.mxu0 0.0
    %874 = vmatprep.subr.mxu0 0.0
    %875 = vmatpush2.xpose.msra.mxu0 0.0
    %876 = vmatprep.subr.mxu0 0.0
    %877 = vmatpush2.xpose.msra.mxu0 0.0
    %878 = vmatprep.subr.mxu0 0.0
    %879 = vmatpush2.xpose.msra.mxu0 0.0
    %880 = vmatprep.subr.mxu0 0.0
    %881 = vmatpush2.xpose.msra.mxu0 0.0
    %882 = vmatprep.subr.mxu0 0.0
    %883 = vmatpush2.xpose.msra.mxu0 0.0
    %884 = vmatprep.subr.mxu0 0.0
    %885 = vmatpush2.xpose.msra.mxu0 0.0
    %886 = vmatprep.subr.mxu0 0.0
    %887 = vmatpush2.xpose.msra.mxu0 0.0
    %888 = vmatprep.subr.mxu0 0.0
    %889 = vmatpush2.xpose.msra.mxu0 0.0
    %890 = vmatprep.subr.mxu0 0.0
    %891 = vmatpush2.xpose.msra.mxu0 0.0
    %892 = vmatprep.subr.mxu0 0.0
    %893 = vmatpush2.xpose.msra.mxu0 0.0
    %894 = vmatprep.mubr.f32.mxu0 0.0
    %895 = vmatmul.mubr.f32.gmra.mxu0 %v828
    %v896 = vpop.f32.mrf.mxu0
    %v897 = vadd.f32 0.0, %v896
    %v898 = vpop.f32.mrf.mxu0
    %899 = vdwg.mxu0
    %v900 = vmul.f32 %v101, %v101
    %v901 = vmul.f32 %v102, %v102
    %v902 = vmul.f32 %v103, %v103
    %v903 = vmul.f32 %v104, %v104
    %v904 = vsel %vm196, %v900, 0.0
    %905 = vadd.xlane.f32.xlu0 %v904
    %v906 = vpop.xlane.xlu0 %905
    %v907 = vsel %vm196, %v901, 0.0
    %908 = vadd.xlane.f32.xlu0 %v907
    %v909 = vpop.xlane.xlu0 %908
    %v910 = vsel %vm196, %v902, 0.0
    %911 = vadd.xlane.f32.xlu0 %v910
    %v912 = vpop.xlane.xlu0 %911
    %v913 = vsel %vm196, %v903, 0.0
    %914 = vadd.xlane.f32.xlu0 %v913
    %v915 = vpop.xlane.xlu0 %914
    %v920 = vlaneseq
    %v921 = vshrl.u32 %v920, 7
    %v922 = vsub.s32 %v111, %v921
    %v923 = vrot.slane %v906, %v922
    %v924 = vlaneseq
    %v925 = vshrl.u32 %v924, 7
    %v926 = vsub.s32 %v111, %v925
    %v927 = vrot.slane %v909, %v926
    %v928 = vlaneseq
    %v929 = vshrl.u32 %v928, 7
    %v930 = vsub.s32 %v111, %v929
    %v931 = vrot.slane %v912, %v930
    %v932 = vlaneseq
    %v933 = vshrl.u32 %v932, 7
    %v934 = vsub.s32 %v111, %v933
    %v935 = vrot.slane %v915, %v934
    %v936 = vsel %vm526, %v923, %v923
    %v937 = vsel %vm528, %v923, %v936
    %v938 = vsel %vm530, %v923, %v937
    %v939 = vsel %vm532, %v923, %v938
    %v940 = vsel %vm534, %v923, %v939
    %v941 = vsel %vm536, %v923, %v940
    %v942 = vsel %vm526, %v927, %v927
    %v943 = vsel %vm528, %v927, %v942
    %v944 = vsel %vm530, %v927, %v943
    %v945 = vsel %vm532, %v927, %v944
    %v946 = vsel %vm534, %v927, %v945
    %v947 = vsel %vm536, %v927, %v946
    %v948 = vsel %vm526, %v931, %v931
    %v949 = vsel %vm528, %v931, %v948
    %v950 = vsel %vm530, %v931, %v949
    %v951 = vsel %vm532, %v931, %v950
    %v952 = vsel %vm534, %v931, %v951
    %v953 = vsel %vm536, %v931, %v952
    %v954 = vsel %vm526, %v935, %v935
    %v955 = vsel %vm528, %v935, %v954
    %v956 = vsel %vm530, %v935, %v955
    %v957 = vsel %vm532, %v935, %v956
    %v958 = vsel %vm534, %v935, %v957
    %v959 = vsel %vm536, %v935, %v958
    %v964 = vadd.f32 %v906, %v941
    %v965 = vadd.f32 %v909, %v947
    %v966 = vadd.f32 %v912, %v953
    %v967 = vadd.f32 %v915, %v959
    %v968 = vmul.f32 %v678, 2.0
    %v969 = vmul.f32 %v751, 2.0
    %v970 = vmul.f32 %v824, 2.0
    %v971 = vmul.f32 %v897, 2.0
    %v972 = vsub.f32 %v964, %v968
    %v973 = vsub.f32 %v965, %v969
    %v974 = vsub.f32 %v966, %v970
    %v975 = vsub.f32 %v967, %v971
    %v976 = vmax.f32 %v972, 1e-12
    %v977 = vmax.f32 %v973, 1e-12
    %v978 = vmax.f32 %v974, 1e-12
    %v979 = vmax.f32 %v975, 1e-12
    %v980 = vrsqrt.pop %v976
    %v981 = vmul.f32 %v976, %v980
    %vm982 = vcmp.eq.f32.partialorder %v976, inf
    %v983 = vsel %vm982, %v976, %v981
    %vm984 = vcmp.eq.f32.partialorder %v976, 0.0
    %v985 = vand.u32 %v976, 2147483648
    %v986 = vsel %vm984, %v985, %v983
    %v987 = vrsqrt.pop %v977
    %v988 = vmul.f32 %v977, %v987
    %vm989 = vcmp.eq.f32.partialorder %v977, inf
    %v990 = vsel %vm989, %v977, %v988
    %vm991 = vcmp.eq.f32.partialorder %v977, 0.0
    %v992 = vand.u32 %v977, 2147483648
    %v993 = vsel %vm991, %v992, %v990
    %v994 = vrsqrt.pop %v978
    %v995 = vmul.f32 %v978, %v994
    %vm996 = vcmp.eq.f32.partialorder %v978, inf
    %v997 = vsel %vm996, %v978, %v995
    %vm998 = vcmp.eq.f32.partialorder %v978, 0.0
    %v999 = vand.u32 %v978, 2147483648
    %v1000 = vsel %vm998, %v999, %v997
    %v1001 = vrsqrt.pop %v979
    %v1002 = vmul.f32 %v979, %v1001
    %vm1003 = vcmp.eq.f32.partialorder %v979, inf
    %v1004 = vsel %vm1003, %v979, %v1002
    %vm1005 = vcmp.eq.f32.partialorder %v979, 0.0
    %v1006 = vand.u32 %v979, 2147483648
    %v1007 = vsel %vm1005, %v1006, %v1004
    %v1008 = vmul.f32 %v986, %v192
    %v1009 = vmul.f32 %v993, %v193
    %v1010 = vmul.f32 %v1000, %v194
    %v1011 = vmul.f32 %v1007, %v195
    %vm1012 = vcmask 60416
    %v1013 = vsel %vm1012, %v107, 0.0
    %1014 = vadd.xlane.f32.xlu0 %v1013
    %v1015 = vpop.xlane.xlu0 %1014
    %v1016 = vsub.f32 %v1015, 1.0
    %v1017 = vmul.f32 %v1015, %v1016
    %v1018 = vmax.f32 %v1017, 1.0
    %v1019 = vmul.f32 %v1015, %v1015
    %v1020 = vmax.f32 %v1019, 1.0
    %v1021 = vrcp.pop %v1020
    %v1022 = vmul.f32 1.0, %v1021
    %vm1023 = vcmask 64512
    %v1024 = vsel %vm1023, %v604, 0.0
    %1025 = vadd.xlane.f32.xlu0 %v1024
    %v1026 = vpop.xlane.xlu0 %1025
    %v1027 = vsel %vm1023, %v605, 0.0
    %1028 = vadd.xlane.f32.xlu0 %v1027
    %v1029 = vpop.xlane.xlu0 %1028
    %v1030 = vsel %vm1023, %v606, 0.0
    %1031 = vadd.xlane.f32.xlu0 %v1030
    %v1032 = vpop.xlane.xlu0 %1031
    %v1033 = vsel %vm1023, %v607, 0.0
    %1034 = vadd.xlane.f32.xlu0 %v1033
    %v1035 = vpop.xlane.xlu0 %1034
    %v1040 = vlaneseq
    %v1041 = vshrl.u32 %v1040, 7
    %v1042 = vsub.s32 %v111, %v1041
    %v1043 = vrot.slane %v1026, %v1042
    %v1044 = vlaneseq
    %v1045 = vshrl.u32 %v1044, 7
    %v1046 = vsub.s32 %v111, %v1045
    %v1047 = vrot.slane %v1029, %v1046
    %v1048 = vlaneseq
    %v1049 = vshrl.u32 %v1048, 7
    %v1050 = vsub.s32 %v111, %v1049
    %v1051 = vrot.slane %v1032, %v1050
    %v1052 = vlaneseq
    %v1053 = vshrl.u32 %v1052, 7
    %v1054 = vsub.s32 %v111, %v1053
    %v1055 = vrot.slane %v1035, %v1054
    %v1056 = vsel %vm525, %v1047, %v1043
    %v1057 = vsel %vm526, %v1051, %v1056
    %v1058 = vsel %vm528, %v1055, %v1057
    %v1060 = vsel %vm1012, %v1058, 0.0
    %1061 = vadd.xlane.f32.xlu0 %v1060
    %v1062 = vpop.xlane.xlu0 %1061
    %v1063 = vsel %vm1023, %v1008, 0.0
    %1064 = vadd.xlane.f32.xlu0 %v1063
    %v1065 = vpop.xlane.xlu0 %1064
    %v1066 = vsel %vm1023, %v1009, 0.0
    %1067 = vadd.xlane.f32.xlu0 %v1066
    %v1068 = vpop.xlane.xlu0 %1067
    %v1069 = vsel %vm1023, %v1010, 0.0
    %1070 = vadd.xlane.f32.xlu0 %v1069
    %v1071 = vpop.xlane.xlu0 %1070
    %v1072 = vsel %vm1023, %v1011, 0.0
    %1073 = vadd.xlane.f32.xlu0 %v1072
    %v1074 = vpop.xlane.xlu0 %1073
    %v1079 = vlaneseq
    %v1080 = vshrl.u32 %v1079, 7
    %v1081 = vsub.s32 %v111, %v1080
    %v1082 = vrot.slane %v1065, %v1081
    %v1083 = vlaneseq
    %v1084 = vshrl.u32 %v1083, 7
    %v1085 = vsub.s32 %v111, %v1084
    %v1086 = vrot.slane %v1068, %v1085
    %v1087 = vlaneseq
    %v1088 = vshrl.u32 %v1087, 7
    %v1089 = vsub.s32 %v111, %v1088
    %v1090 = vrot.slane %v1071, %v1089
    %v1091 = vlaneseq
    %v1092 = vshrl.u32 %v1091, 7
    %v1093 = vsub.s32 %v111, %v1092
    %v1094 = vrot.slane %v1074, %v1093
    %v1095 = vsel %vm525, %v1086, %v1082
    %v1096 = vsel %vm526, %v1090, %v1095
    %v1097 = vsel %vm528, %v1094, %v1096
    %v1099 = vsel %vm1012, %v1097, 0.0
    %1100 = vadd.xlane.f32.xlu0 %v1099
    %v1101 = vpop.xlane.xlu0 %1100
    %v1102 = vrcp.pop %v1018
    %v1103 = vmul.f32 %v1062, %v1102
    %v1104 = vmax.f32 %v1103, 1e-12
    %v1105 = vrcp.pop %v1104
    %v1106 = vmul.f32 1.0, %v1105
    %v1108 = vlaneseq
    %v1109 = vshrl.u32 %v1108, 7
    %v1110 = vsub.s32 0, %v1109
    %v1111 = vrot.slane %v1106, %v1110
    %v1112 = vlaneseq
    %v1113 = vshrl.u32 %v1112, 7
    %v1114 = vsub.s32 1, %v1113
    %v1115 = vrot.slane %v1106, %v1114
    %v1116 = vlaneseq
    %v1117 = vshrl.u32 %v1116, 7
    %v1118 = vsub.s32 2, %v1117
    %v1119 = vrot.slane %v1106, %v1118
    %v1120 = vlaneseq
    %v1121 = vshrl.u32 %v1120, 7
    %v1122 = vsub.s32 3, %v1121
    %v1123 = vrot.slane %v1106, %v1122
    %v1128 = vmul.f32 %v1101, %v1102
    %v1129 = vmax.f32 %v1128, 1e-12
    %v1130 = vrcp.pop %v1129
    %v1131 = vmul.f32 1.0, %v1130
    %v1133 = vlaneseq
    %v1134 = vshrl.u32 %v1133, 7
    %v1135 = vsub.s32 0, %v1134
    %v1136 = vrot.slane %v1131, %v1135
    %v1137 = vlaneseq
    %v1138 = vshrl.u32 %v1137, 7
    %v1139 = vsub.s32 1, %v1138
    %v1140 = vrot.slane %v1131, %v1139
    %v1141 = vlaneseq
    %v1142 = vshrl.u32 %v1141, 7
    %v1143 = vsub.s32 2, %v1142
    %v1144 = vrot.slane %v1131, %v1143
    %v1145 = vlaneseq
    %v1146 = vshrl.u32 %v1145, 7
    %v1147 = vsub.s32 3, %v1146
    %v1148 = vrot.slane %v1131, %v1147
    %v1153 = vmul.f32 %v604, %v1111
    %v1154 = vmul.f32 %v605, %v1115
    %v1155 = vmul.f32 %v606, %v1119
    %v1156 = vmul.f32 %v607, %v1123
    %v1157 = vmul.f32 %v1008, %v1136
    %v1158 = vmul.f32 %v1009, %v1140
    %v1159 = vmul.f32 %v1010, %v1144
    %v1160 = vmul.f32 %v1011, %v1148
    %v1161 = vsub.f32 %v1153, %v1157
    %v1162 = vsub.f32 %v1154, %v1158
    %v1163 = vsub.f32 %v1155, %v1159
    %v1164 = vsub.f32 %v1156, %v1160
    %v1165 = vand.u32 2147483647, %v1161
    %v1166 = vand.u32 2147483647, %v1162
    %v1167 = vand.u32 2147483647, %v1163
    %v1168 = vand.u32 2147483647, %v1164
    %vm1169 = vcmp.lt.f32.partialorder %v1165, 1.0
    %vm1170 = vcmp.lt.f32.partialorder %v1166, 1.0
    %vm1171 = vcmp.lt.f32.partialorder %v1167, 1.0
    %vm1172 = vcmp.lt.f32.partialorder %v1168, 1.0
    %v1173 = vmul.f32 %v1165, 0.5
    %v1174 = vmul.f32 %v1166, 0.5
    %v1175 = vmul.f32 %v1167, 0.5
    %v1176 = vmul.f32 %v1168, 0.5
    %v1177 = vmul.f32 %v1173, %v1165
    %v1178 = vmul.f32 %v1174, %v1166
    %v1179 = vmul.f32 %v1175, %v1167
    %v1180 = vmul.f32 %v1176, %v1168
    %v1181 = vsub.f32 %v1165, 0.5
    %v1182 = vsub.f32 %v1166, 0.5
    %v1183 = vsub.f32 %v1167, 0.5
    %v1184 = vsub.f32 %v1168, 0.5
    %v1185 = vsel %vm1169, %v1177, %v1181
    %v1186 = vsel %vm1170, %v1178, %v1182
    %v1187 = vsel %vm1171, %v1179, %v1183
    %v1188 = vsel %vm1172, %v1180, %v1184
    %v1189 = vsel %vm1023, %v1185, 0.0
    %1190 = vadd.xlane.f32.xlu0 %v1189
    %v1191 = vpop.xlane.xlu0 %1190
    %v1192 = vsel %vm1023, %v1186, 0.0
    %1193 = vadd.xlane.f32.xlu0 %v1192
    %v1194 = vpop.xlane.xlu0 %1193
    %v1195 = vsel %vm1023, %v1187, 0.0
    %1196 = vadd.xlane.f32.xlu0 %v1195
    %v1197 = vpop.xlane.xlu0 %1196
    %v1198 = vsel %vm1023, %v1188, 0.0
    %1199 = vadd.xlane.f32.xlu0 %v1198
    %v1200 = vpop.xlane.xlu0 %1199
    %v1205 = vlaneseq
    %v1206 = vshrl.u32 %v1205, 7
    %v1207 = vsub.s32 %v111, %v1206
    %v1208 = vrot.slane %v1191, %v1207
    %v1209 = vlaneseq
    %v1210 = vshrl.u32 %v1209, 7
    %v1211 = vsub.s32 %v111, %v1210
    %v1212 = vrot.slane %v1194, %v1211
    %v1213 = vlaneseq
    %v1214 = vshrl.u32 %v1213, 7
    %v1215 = vsub.s32 %v111, %v1214
    %v1216 = vrot.slane %v1197, %v1215
    %v1217 = vlaneseq
    %v1218 = vshrl.u32 %v1217, 7
    %v1219 = vsub.s32 %v111, %v1218
    %v1220 = vrot.slane %v1200, %v1219
    %v1221 = vsel %vm525, %v1212, %v1208
    %v1222 = vsel %vm526, %v1216, %v1221
    %v1223 = vsel %vm528, %v1220, %v1222
    %v1225 = vsel %vm1012, %v1223, 0.0
    %1226 = vadd.xlane.f32.xlu0 %v1225
    %v1227 = vpop.xlane.xlu0 %1226
    %v1228 = vmul.f32 %v1227, %v1022
    %v1229 = vsel %vm1012, %v60, 0.0
    %1230 = vadd.xlane.f32.xlu0 %v1229
    %v1231 = vpop.xlane.xlu0 %1230
    %s1232 = smul.u32 0, 4
    %v1233 = vstv %s1232
    %v1234 = vadd.s32 %v1233, %v109
    %vm1235 = vcmp.gt.f32.partialorder %v1231, 1.0
    %vm1236 = vcmp.lt.s32.totalorder %v1234, 4
    %vm1237 = vmand %vm1235, %vm1236
    %v1238 = vld [vmem:[#allocation8] sm:$0x1]
    %v1239 = vsel %vm1237, %v1228, 0.0
    %vm1240 = vcmask 1043456
    %v1241 = vsel %vm1240, %v1239, 0.0
    %v1242 = vrot.slane %v1241, 4
    %v1243 = vadd.f32 %v1241, %v1242
    %v1244 = vrot.slane %v1243, 2
    %v1245 = vadd.f32 %v1243, %v1244
    %v1246 = vrot.slane %v1245, 1
    %v1247 = vadd.f32 %v1245, %v1246
    %v1248 = vadd.f32 %v1238, %v1247
    %vm1249 = vcmask 0
    %1250 = vst.msk [vmem:[#allocation8] sm:$0x1] %vm1249, %v1248
    // Predicated region
    $region30: #{tpu_custom_call.1} parent=1 // pred_check
      _
    $region31: #{tpu_custom_call.1} parent=1 // pred_check_branch
      %1252 = sbr.rel (0) target = $region33
    $region32: #{tpu_custom_call.1} parent=1 // pred_region
      %s1254 = ssub.s32 16, 16
      %1255 = vsyncadd [#allocation4], %s1254
      %s1257 = sshll.u32 [#allocation8], 4
      %s1258 = int_to_ptr.vmem [resolvable:$true] %s1257
      %1260 = dma.vmem_to_hbm [thread:$0]  %s1258, 16, %s3, [#allocation4]
    $region33: #{tpu_custom_call.1} parent=1 // pred_fallthru
      _
    // Predicated region
    $region34: #{tpu_custom_call.1} parent=1 // pred_check
      _
    $region35: #{tpu_custom_call.1} parent=1 // pred_check_branch
      %1262 = sbr.rel (0) target = $region37
    $region36: #{tpu_custom_call.1} parent=1 // pred_region
      %1263 = dma.done [#allocation4], 16
    $region37: #{tpu_custom_call.1} parent=1 // pred_fallthru
      _
    %1264 = vsyncpa [#allocation3], 1
    %1265 = vsyncpa [#allocation6], 1
    %1266 = vsyncpa [#allocation4], 1

</llo_original>
